<compile_context>
chip_gen: v7x
topology: tpu7x:2x2x1
jax: 0.10.0
libtpu: 0.0.40
codegen_flags: <defaults>
</compile_context>

<pallas_src>
import numpy as np
import jax
import jax.numpy as jnp
from jax import lax
from jax.experimental import pallas as pl
from jax.experimental.pallas import tpu as pltpu


_PAD = 8  # sublane-aligned top pad; the image interior lives at scratch rows [_PAD, _PAD+H)


# ------------------------------- Pallas kernel -------------------------------

def _csphet_kernel(x_ref, w_ref, o_ref, xp_ref):
    # x_ref : (1, H, L)          f32 input image, lane-dense (L = W*C = 128 lanes)
    # w_ref : (2, 3L, L)         bf16 row-band weights; [layer, dy*L + lane_in, lane_out]
    # o_ref : (1, H, L)          f32 output image, lane-dense
    # xp_ref: (_PAD+H+8, L) f32  VMEM scratch; rows _PAD-1 and _PAD+H are the zero halo rows
    H = o_ref.shape[1]
    L = o_ref.shape[2]

    # Zero only the halo neighbourhoods, as two aligned 8-row groups (plain full-vreg
    # stores).  Rows 0.._PAD-1 contain the top halo row (_PAD-1); rows _PAD+H.._PAD+H+7
    # contain the bottom halo row (_PAD+H).  Other padding rows are never read.
    # (Unconditional every grid step: cheap, and safe under v7x megacore sharding.)
    xp_ref[0:_PAD, :] = jnp.zeros((_PAD, L), jnp.float32)
    xp_ref[_PAD + H:_PAD + H + 8, :] = jnp.zeros((8, L), jnp.float32)

    # Image interior: store starts at sublane offset 8 -> unmasked stores.
    xp_ref[_PAD:_PAD + H, :] = x_ref[0]

    def band_conv(layer):
        # Fold the 3 dy taps into ONE K=3L MXU matmul: concatenate the 3 row-shifted
        # views along lanes (no zero accumulator, no VALU adds; MXU accumulates).
        xc = jnp.concatenate(
            [xp_ref[_PAD - 1 + dy:_PAD - 1 + dy + H, :] for dy in range(3)], axis=1)
        return jnp.dot(xc.astype(jnp.bfloat16), w_ref[layer],
                       preferred_element_type=jnp.float32)

    h1 = band_conv(0)                  # HetConv #1 (activation never leaves VMEM)
    xp_ref[_PAD:_PAD + H, :] = h1      # re-pad for layer 2 (halo rows are still zero)
    o_ref[0] = band_conv(1).astype(o_ref.dtype)   # HetConv #2, unmasked 128-lane store


def csp_het_bottleneck_pallas(x_nchw, w_bands):
    """x_nchw: (N, C, H, W) f32;  w_bands: (2, 3*W*C, W*C) bf16 packed band weights."""
    N, C, H, W = x_nchw.shape
    L = W * C
    assert w_bands.shape == (2, 3 * L, L)

    # Boundary glue only: NCHW -> lane-dense (N, H, W*C).  Callers holding NHWC data
    # can feed it directly (reshape only) and skip the transpose.
    x_flat = jnp.transpose(x_nchw, (0, 2, 3, 1)).reshape(N, H, L)

    flops = 2 * 2 * N * H * W * C * 9 * C                        # 2 HetConv layers
    bytes_accessed = 4 * x_flat.size + 4 * N * H * L + 2 * w_bands.size  # bf16 weights

    # NOTE: band weights grow as 3*(W*C)^2; if this kernel is generalized beyond
    # W*C = 128, tile the output-lane axis with a grid axis and set vmem_limit_bytes
    # (v7x has only 64 MiB physical VMEM).  At this size everything is tiny.
    out_flat = pl.pallas_call(
        _csphet_kernel,
        out_shape=jax.ShapeDtypeStruct((N, H, L), x_nchw.dtype),
        grid_spec=pltpu.PrefetchScalarGridSpec(
            num_scalar_prefetch=0,
            grid=(N,),  # batch axis; "parallel" shards across v7x's 2 TensorCores
            in_specs=[
                pl.BlockSpec((1, H, L), lambda n: (n, 0, 0)),
                pl.BlockSpec((2, 3 * L, L), lambda n: (0, 0, 0)),  # constant index: DMA once
            ],
            out_specs=pl.BlockSpec((1, H, L), lambda n: (n, 0, 0)),
            scratch_shapes=[pltpu.VMEM((_PAD + H + 8, L), jnp.float32)],
        ),
        compiler_params=pltpu.CompilerParams(
            dimension_semantics=("parallel",)),
        cost_estimate=pl.CostEstimate(flops=flops, transcendentals=0,
                                      bytes_accessed=bytes_accessed),
    )(x_flat, w_bands)

    return jnp.transpose(out_flat.reshape(N, H, W, C), (0, 3, 1, 2))


# --------------------- HetConv weight assembly (glue, numpy) ---------------------

def _branch_indices(C, p, i):
    idx3 = list(range(i, C, p))
    idx1 = [j for j in range(C) if j not in idx3]
    return idx3, idx1


def make_band_weights(w3_list, w1_list, C, p, W):
    """Fold HetConv branch weights into 3 row-band matrices, shape (3, W*C, W*C) f32."""
    Cb = C // p
    # Dense HWIO weight: Wd[dy, dx, ci, co]
    Wd = np.zeros((3, 3, C, C), np.float32)
    for i in range(p):
        idx3, idx1 = _branch_indices(C, p, i)
        w3 = np.asarray(w3_list[i])   # (Cb, C//p, 3, 3)      OIHW
        w1 = np.asarray(w1_list[i])   # (Cb, C - C//p, 1, 1)
        for j in range(Cb):
            oc = j * p + i            # interleaved output channel (matches reference permute)
            for a, ci in enumerate(idx3):
                Wd[:, :, ci, oc] = w3[j, a]
            for a, ci in enumerate(idx1):
                Wd[1, 1, ci, oc] = w1[j, a, 0, 0]
    # Row-band form: band[dy, wi*C+ci, wo*C+co] = Wd[dy, wi-wo+1, ci, co].
    # Horizontal 'same' padding is absorbed by dropping out-of-range wi.
    band = np.zeros((3, W * C, W * C), np.float32)
    for dy in range(3):
        for wo in range(W):
            for dx in range(3):
                wi = wo + dx - 1
                if 0 <= wi < W:
                    band[dy, wi * C:(wi + 1) * C, wo * C:(wo + 1) * C] = Wd[dy, dx]
    return band


def pack_band_weights(band1, band2):
    """Stack both layers' bands into one (2, 3*L, L) bf16 array (single DMA stream)."""
    L = band1.shape[-1]
    packed = np.stack([band1.reshape(3 * L, L), band2.reshape(3 * L, L)], axis=0)
    return jnp.asarray(packed, dtype=jnp.bfloat16)


# --------------- Pure-JAX reference (mirrors the PyTorch forward) ---------------

def hetconv_ref(x_nchw, w3_list, w1_list, p):
    N, C, H, W = x_nchw.shape
    dn = ("NCHW", "OIHW", "NCHW")
    outs = []
    for i in range(p):
        idx3, idx1 = _branch_indices(C, p, i)
        o3 = lax.conv_general_dilated(x_nchw[:, idx3], w3_list[i],
                                      (1, 1), ((1, 1), (1, 1)),
                                      dimension_numbers=dn)
        o1 = lax.conv_general_dilated(x_nchw[:, idx1], w1_list[i],
                                      (1, 1), ((0, 0), (0, 0)),
                                      dimension_numbers=dn)
        outs.append(o3 + o1)
    cat = jnp.concatenate(outs, axis=1)
    Cb = C // p
    return cat.reshape(N, p, Cb, H, W).transpose(0, 2, 1, 3, 4).reshape(N, C, H, W)


# ------------------------------------ Main ------------------------------------

if __name__ == "__main__":
    key = jax.random.PRNGKey(0)
    N, C, H, W = 2, 8, 16, 16   # dim=8, HetConv default p=4 -> W*C = 128 lanes
    p = 4
    Cb = C // p

    keys = jax.random.split(key, 1 + 4 * p)
    x = jax.random.normal(keys[0], (N, C, H, W), jnp.float32)

    w3_l1, w1_l1, w3_l2, w1_l2 = [], [], [], []
    k = 1
    for i in range(p):
        w3_l1.append(0.1 * jax.random.normal(keys[k], (Cb, C // p, 3, 3), jnp.float32)); k += 1
        w1_l1.append(0.1 * jax.random.normal(keys[k], (Cb, C - C // p, 1, 1), jnp.float32)); k += 1
        w3_l2.append(0.1 * jax.random.normal(keys[k], (Cb, C // p, 3, 3), jnp.float32)); k += 1
        w1_l2.append(0.1 * jax.random.normal(keys[k], (Cb, C - C // p, 1, 1), jnp.float32)); k += 1

    band_w1 = make_band_weights(w3_l1, w1_l1, C, p, W)
    band_w2 = make_band_weights(w3_l2, w1_l2, C, p, W)
    w_bands = pack_band_weights(band_w1, band_w2)   # (2, 3*W*C, W*C) bf16

    out = csp_het_bottleneck_pallas(x, w_bands)
    out = jax.block_until_ready(out)

    # Reference: literal branch-wise HetConv forward, applied twice (f32).
    ref = hetconv_ref(hetconv_ref(x, w3_l1, w1_l1, p), w3_l2, w1_l2, p)
    ref = jax.block_until_ready(ref)

    # Tolerance loosened vs. the f32 version because weights/activations enter the MXU
    # in bf16 (accumulation in f32); two stacked bf16 conv layers -> ~1e-2 level error.
    np.testing.assert_allclose(np.asarray(out), np.asarray(ref), rtol=5e-2, atol=5e-2)
    print("KERNEL_OK")
</pallas_src>

<mosaic_0001>
module attributes {stable_mosaic.version = 11 : i64} {
  func.func @_csphet_kernel(%arg0: i32, %arg1: memref<1x16x128xf32, #tpu.memory_space<vmem>>, %arg2: memref<2x384x128xbf16, #tpu.memory_space<vmem>>, %arg3: memref<1x16x128xf32, #tpu.memory_space<vmem>>, %arg4: memref<32x128xf32, #tpu.memory_space<vmem>>) attributes {dimension_semantics = [#tpu.dimension_semantics<parallel>], iteration_bounds = array<i64: 2>, scalar_prefetch = 0 : i64, scratch_operands = 1 : i64, tpu.core_type = #tpu.core_type<tc>, window_params = [{transform_indices = @transform_0, window_bounds = array<i64: 1, 16, 128>}, {pipeline_mode = #tpu.pipeline_mode<synchronous>, transform_indices = @transform_1, window_bounds = array<i64: 2, 384, 128>}, {transform_indices = @transform_2, window_bounds = array<i64: 1, 16, 128>}]} {
    %cst = arith.constant 0.000000e+00 : f32
    %0 = vector.broadcast %cst : f32 to vector<8x128xf32>
    %c0 = arith.constant 0 : index
    %c0_0 = arith.constant 0 : index
    %1 = vector.load %arg4[%c0, %c0_0] : memref<32x128xf32, #tpu.memory_space<vmem>>, vector<8x128xf32>
    tpu.vector_store %arg4[%c0, %c0_0], %0 {strides = array<i32>} : memref<32x128xf32, #tpu.memory_space<vmem>>, vector<8x128xf32>,
    %cst_1 = arith.constant 0.000000e+00 : f32
    %2 = vector.broadcast %cst_1 : f32 to vector<8x128xf32>
    %c24 = arith.constant 24 : index
    %c0_2 = arith.constant 0 : index
    %3 = vector.load %arg4[%c24, %c0_2] : memref<32x128xf32, #tpu.memory_space<vmem>>, vector<8x128xf32>
    tpu.vector_store %arg4[%c24, %c0_2], %2 {strides = array<i32>} : memref<32x128xf32, #tpu.memory_space<vmem>>, vector<8x128xf32>,
    %c0_3 = arith.constant 0 : index
    %c0_4 = arith.constant 0 : index
    %c0_5 = arith.constant 0 : index
    %4 = vector.load %arg1[%c0_3, %c0_4, %c0_5] : memref<1x16x128xf32, #tpu.memory_space<vmem>>, vector<1x16x128xf32>
    %5 = vector.shape_cast %4 : vector<1x16x128xf32> to vector<16x128xf32>
    %c8 = arith.constant 8 : index
    %c0_6 = arith.constant 0 : index
    %6 = vector.load %arg4[%c8, %c0_6] : memref<32x128xf32, #tpu.memory_space<vmem>>, vector<16x128xf32>
    tpu.vector_store %arg4[%c8, %c0_6], %5 {strides = array<i32>} : memref<32x128xf32, #tpu.memory_space<vmem>>, vector<16x128xf32>,
    %c7 = arith.constant 7 : index
    %c0_7 = arith.constant 0 : index
    %7 = vector.load %arg4[%c7, %c0_7] : memref<32x128xf32, #tpu.memory_space<vmem>>, vector<16x128xf32>
    %c8_8 = arith.constant 8 : index
    %c0_9 = arith.constant 0 : index
    %8 = vector.load %arg4[%c8_8, %c0_9] : memref<32x128xf32, #tpu.memory_space<vmem>>, vector<16x128xf32>
    %c9 = arith.constant 9 : index
    %c0_10 = arith.constant 0 : index
    %9 = vector.load %arg4[%c9, %c0_10] : memref<32x128xf32, #tpu.memory_space<vmem>>, vector<16x128xf32>
    %10 = tpu.concatenate %7, %8, %9 in 1 : vector<16x128xf32>, vector<16x128xf32>, vector<16x128xf32> -> vector<16x384xf32>
    %11 = arith.truncf %10 : vector<16x384xf32> to vector<16x384xbf16>
    %c0_11 = arith.constant 0 : index
    %c0_12 = arith.constant 0 : index
    %c0_13 = arith.constant 0 : index
    %12 = vector.load %arg2[%c0_11, %c0_12, %c0_13] : memref<2x384x128xbf16, #tpu.memory_space<vmem>>, vector<1x384x128xbf16>
    %13 = vector.shape_cast %12 : vector<1x384x128xbf16> to vector<384x128xbf16>
    %cst_14 = arith.constant dense<0.000000e+00> : vector<16x128xf32>
    %14 = tpu.matmul %11, %13, %cst_14 {dimension_numbers = #tpu.dot_dimension_numbers<[1], [0], [0], [1], [0, 0, 1, 1], [], []>} : vector<16x384xbf16>, vector<384x128xbf16>, vector<16x128xf32> -> vector<16x128xf32>
    %c8_15 = arith.constant 8 : index
    %c0_16 = arith.constant 0 : index
    %15 = vector.load %arg4[%c8_15, %c0_16] : memref<32x128xf32, #tpu.memory_space<vmem>>, vector<16x128xf32>
    tpu.vector_store %arg4[%c8_15, %c0_16], %14 {strides = array<i32>} : memref<32x128xf32, #tpu.memory_space<vmem>>, vector<16x128xf32>,
    %c7_17 = arith.constant 7 : index
    %c0_18 = arith.constant 0 : index
    %16 = vector.load %arg4[%c7_17, %c0_18] : memref<32x128xf32, #tpu.memory_space<vmem>>, vector<16x128xf32>
    %c8_19 = arith.constant 8 : index
    %c0_20 = arith.constant 0 : index
    %17 = vector.load %arg4[%c8_19, %c0_20] : memref<32x128xf32, #tpu.memory_space<vmem>>, vector<16x128xf32>
    %c9_21 = arith.constant 9 : index
    %c0_22 = arith.constant 0 : index
    %18 = vector.load %arg4[%c9_21, %c0_22] : memref<32x128xf32, #tpu.memory_space<vmem>>, vector<16x128xf32>
    %19 = tpu.concatenate %16, %17, %18 in 1 : vector<16x128xf32>, vector<16x128xf32>, vector<16x128xf32> -> vector<16x384xf32>
    %20 = arith.truncf %19 : vector<16x384xf32> to vector<16x384xbf16>
    %c1 = arith.constant 1 : index
    %c0_23 = arith.constant 0 : index
    %c0_24 = arith.constant 0 : index
    %21 = vector.load %arg2[%c1, %c0_23, %c0_24] : memref<2x384x128xbf16, #tpu.memory_space<vmem>>, vector<1x384x128xbf16>
    %22 = vector.shape_cast %21 : vector<1x384x128xbf16> to vector<384x128xbf16>
    %cst_25 = arith.constant dense<0.000000e+00> : vector<16x128xf32>
    %23 = tpu.matmul %20, %22, %cst_25 {dimension_numbers = #tpu.dot_dimension_numbers<[1], [0], [0], [1], [0, 0, 1, 1], [], []>} : vector<16x384xbf16>, vector<384x128xbf16>, vector<16x128xf32> -> vector<16x128xf32>
    %c0_26 = arith.constant 0 : index
    %c0_27 = arith.constant 0 : index
    %c0_28 = arith.constant 0 : index
    %24 = vector.load %arg3[%c0_26, %c0_27, %c0_28] : memref<1x16x128xf32, #tpu.memory_space<vmem>>, vector<1x16x128xf32>
    %25 = vector.shape_cast %24 : vector<1x16x128xf32> to vector<16x128xf32>
    %26 = vector.shape_cast %23 : vector<16x128xf32> to vector<1x16x128xf32>
    tpu.vector_store %arg3[%c0_26, %c0_27, %c0_28], %26 {strides = array<i32>} : memref<1x16x128xf32, #tpu.memory_space<vmem>>, vector<1x16x128xf32>,
    return
  }
  func.func @transform_0(%arg0: i32) -> (i32, i32, i32) {
    %c0_i32 = arith.constant 0 : i32
    %c0_i32_0 = arith.constant 0 : i32
    %c0_i32_1 = arith.constant 0 : i32
    return %arg0, %c0_i32, %c0_i32_0 : i32, i32, i32
  }
  func.func @transform_1(%arg0: i32) -> (i32, i32, i32) {
    %c0_i32 = arith.constant 0 : i32
    %c0_i32_0 = arith.constant 0 : i32
    %c0_i32_1 = arith.constant 0 : i32
    %c0_i32_2 = arith.constant 0 : i32
    return %c0_i32, %c0_i32_0, %c0_i32_1 : i32, i32, i32
  }
  func.func @transform_2(%arg0: i32) -> (i32, i32, i32) {
    %c0_i32 = arith.constant 0 : i32
    %c0_i32_0 = arith.constant 0 : i32
    %c0_i32_1 = arith.constant 0 : i32
    return %arg0, %c0_i32, %c0_i32_0 : i32, i32, i32
  }
}

</mosaic_0001>

<llo_original>
// kernel: tpu_custom_call.1
$region0: #{tpu_custom_call.1}
  #allocation0 [shape = 'u32[]', space=smem, size = 0x4, offset = 0x4, fixed_abs, tag = 'smem constant byte address 0x4 - core index']
  #allocation1 [shape = 'u32[144,128]{1,0:T(1,128)}', space=vmem, size = 0x12000, scoped, tag = 'internal scratch']
  #allocation2 [shape = 'f32[32,128]{1,0:T(8,128)}', space=vmem, size = 0x4000, scoped, tag = 'scratch operand']
  %s0 = inlined_call_operand.hbm [shape: f32[2,16,128], index: 0, kind: input, shape index: {}]
  %s1 = inlined_call_operand.hbm [shape: bf16[2,384,128], index: 1, kind: input, shape index: {}]
  %s2 = inlined_call_operand.hbm [shape: f32[2,16,128], index: 2, kind: output, shape index: {}]
  %s3 = sld [smem:[#allocation0]]
  $region49: #{tpu_custom_call.1} parent=0
    _
  %s5 = ssub.s32 1, %s3
  %s6 = scalar_select 0, %s5, %s3
  $region1: #{tpu_custom_call.1} parent=0
    #allocation3 [shape = 'u8[16384]{0}', space=vmem, size = 0x4000, scoped, tag = 'input window, operand 0']
    #allocation4 [shape = 's32[2]{0}', space=sflag, size = 0x8, scoped, tag = 'scoped memory for tpu_custom_call.1']
    #allocation5 [shape = 's32[2]{0}', space=sflag, size = 0x8, scoped, tag = 'scoped memory for tpu_custom_call.1']
    #allocation6 [shape = 'u8[196608]{0}', space=vmem, size = 0x30000, scoped, tag = 'input window, operand 1, single buffered']
    #allocation7 [shape = 's32[1]{0}', space=sflag, size = 0x4, scoped, tag = 'scoped memory for tpu_custom_call.1']
    #allocation8 [shape = 'u8[16384]{0}', space=vmem, size = 0x4000, scoped, tag = 'output window, operand 0']
    %7 = vsyncpa [#allocation4], 0
    %s8 = scalar_lea.sflag [#allocation4], 1
    %9 = vsyncpa %s8, 0
    %10 = vsyncpa [#allocation7], 0
    %11 = vsyncpa [#allocation5], 0
    %s12 = scalar_lea.sflag [#allocation5], 1
    %13 = vsyncpa %s12, 0
    loop: start=0, step=1, limit=4
    $region2: #{tpu_custom_call.1} parent=1 // loop_pre_header
      _
    $region3: #{tpu_custom_call.1} parent=1 // loop_header
      %s15 = sphi 0, %s19
      %p16 = scmp.ge.s32.totalorder %s15, 4
      %s25 = sphi 0, %s27
      %s28 = sphi 0, %s25
      %s29 = sphi 0, %s28
      %s45 = sphi 0, %s29
      %s49 = sphi 0, %s49
      %s51 = sphi 0, %s49
      %s52 = sphi 0, %s51
      %s66 = sphi 0, %s52
      %s72 = sphi 0, %s74
      %s75 = sphi 0, %s72
      %s76 = sphi 0, %s75
      %s92 = sphi 0, %s76
    $region4: #{tpu_custom_call.1} parent=1 // loop_header_branch
      %18 = sbr.rel (%p16) target = $region8
    $region5: #{tpu_custom_call.1} parent=1 // loop_body
      %s20 = ssub.s32 %s15, 1
      %s21 = ssub.s32 %s15, 2
      %s22 = sadd.s32 %s15, 1
      %s23 = ssub.s32 %s15, %s22
      %p24 = scmp.eq.s32.totalorder %s23, 0
      %s26 = sadd.s32 %s25, 1
      %s27 = scalar_select %p24, %s25, %s26
      %p30 = pneg %p24
      %p31 = scmp.eq.s32.totalorder %s15, 1
      %p32 = por %p30, %p31
      %p33 = scmp.ne.s32.totalorder %s25, %s28
      %p34 = scmp.eq.s32.totalorder %s15, 0
      %p35 = por %p33, %p34
      %p36 = scmp.ne.s32.totalorder %s25, %s28
      %p37 = scmp.eq.s32.totalorder %s20, 1
      %p38 = por %p36, %p37
      %p39 = scmp.ne.s32.totalorder %s28, %s29
      %p40 = scmp.eq.s32.totalorder %s20, 0
      %p41 = por %p39, %p40
      %p42 = scmp.ne.s32.totalorder %s28, %s29
      %p43 = scmp.eq.s32.totalorder %s21, 1
      %p44 = por %p42, %p43
      %p46 = scmp.ne.s32.totalorder %s29, %s45
      %p47 = scmp.eq.s32.totalorder %s21, 0
      %p48 = por %p46, %p47
      %s50 = sadd.s32 %s49, 1
      %p53 = scmp.eq.s32.totalorder %s15, 1
      %p54 = scmp.ne.s32.totalorder %s49, %s51
      %p55 = scmp.eq.s32.totalorder %s15, 0
      %p56 = por %p54, %p55
      %p57 = scmp.ne.s32.totalorder %s49, %s51
      %p58 = scmp.eq.s32.totalorder %s20, 1
      %p59 = por %p57, %p58
      %p60 = scmp.ne.s32.totalorder %s51, %s52
      %p61 = scmp.eq.s32.totalorder %s20, 0
      %p62 = por %p60, %p61
      %p63 = scmp.ne.s32.totalorder %s51, %s52
      %p64 = scmp.eq.s32.totalorder %s21, 1
      %p65 = por %p63, %p64
      %p67 = scmp.ne.s32.totalorder %s52, %s66
      %p68 = scmp.eq.s32.totalorder %s21, 0
      %p69 = por %p67, %p68
      %s70 = ssub.s32 %s15, %s22
      %p71 = scmp.eq.s32.totalorder %s70, 0
      %s73 = sadd.s32 %s72, 1
      %s74 = scalar_select %p71, %s72, %s73
      %p77 = pneg %p71
      %p78 = scmp.eq.s32.totalorder %s15, 1
      %p79 = por %p77, %p78
      %p80 = scmp.ne.s32.totalorder %s72, %s75
      %p81 = scmp.eq.s32.totalorder %s15, 0
      %p82 = por %p80, %p81
      %p83 = scmp.ne.s32.totalorder %s72, %s75
      %p84 = scmp.eq.s32.totalorder %s20, 1
      %p85 = por %p83, %p84
      %p86 = scmp.ne.s32.totalorder %s75, %s76
      %p87 = scmp.eq.s32.totalorder %s20, 0
      %p88 = por %p86, %p87
      %p89 = scmp.ne.s32.totalorder %s75, %s76
      %p90 = scmp.eq.s32.totalorder %s21, 1
      %p91 = por %p89, %p90
      %p93 = scmp.ne.s32.totalorder %s76, %s92
      %p94 = scmp.eq.s32.totalorder %s21, 0
      %p95 = por %p93, %p94
      %p96 = scmp.le.s32.totalorder 1, %s15
      %p97 = scmp.lt.s32.totalorder %s15, 3
      %p98 = pnand %p96, %p97
      %p99 = pneg %p98
      // Predicated region
      $region9: #{tpu_custom_call.1} parent=5 // pred_check
        _
      $region10: #{tpu_custom_call.1} parent=5 // pred_check_branch
        %101 = sbr.rel (%p98) target = $region12
      $region11: #{tpu_custom_call.1} parent=5 // pred_region
        %s102 = ssub.s32 %s15, 1
        // Predicated region
        $region13: #{tpu_custom_call.1} parent=11 // pred_check
          %p103 = pneg %p62
        $region14: #{tpu_custom_call.1} parent=11 // pred_check_branch
          %105 = sbr.rel (%p103) target = $region16
        $region15: #{tpu_custom_call.1} parent=11 // pred_region
          %s107 = ssub.s32 6144, 6144
          %108 = vsyncadd [#allocation7], %s107
          %s109 = sshll.u32 [#allocation6], 4
          %s110 = int_to_ptr.vmem [resolvable:$true] %s109
          %115 = dma.hbm_to_vmem [thread:$0]  %s1, 6144, %s110, [#allocation7], 64, 64, 4
        $region16: #{tpu_custom_call.1} parent=11 // pred_fallthru
          _
      $region12: #{tpu_custom_call.1} parent=5 // pred_fallthru
        _
      %p116 = scmp.lt.s32.totalorder %s15, 2
      // Predicated region
      $region17: #{tpu_custom_call.1} parent=5 // pred_check
        %p117 = pneg %p116
      $region18: #{tpu_custom_call.1} parent=5 // pred_check_branch
        %119 = sbr.rel (%p117) target = $region20
      $region19: #{tpu_custom_call.1} parent=5 // pred_region
        // Predicated region
        $region21: #{tpu_custom_call.1} parent=19 // pred_check
          %p120 = pneg %p35
        $region22: #{tpu_custom_call.1} parent=19 // pred_check_branch
          %122 = sbr.rel (%p120) target = $region24
        $region23: #{tpu_custom_call.1} parent=19 // pred_region
          %s123 = sand.u32 %s25, 1
          %s124 = scalar_lea.sflag [#allocation4], %s123
          %s125 = sand.u32 %s25, 1
          %s126 = smul.addr %s125, 16
          %s127 = scalar_lea.vmem [#allocation3], %s126
          %s129 = ssub.s32 256, 256
          %130 = vsyncadd %s124, %s129
          %s131 = smul.addr %s15, 2
          %s132 = smul.addr %s131, 128
          %s133 = scalar_lea.hbm %s0, %s132
          %s134 = sshll.u32 %s127, 4
          %s135 = int_to_ptr.vmem [resolvable:$true] %s134
          %140 = dma.hbm_to_vmem [thread:$0]  %s133, 256, %s135, %s124, 128, 128, 8
        $region24: #{tpu_custom_call.1} parent=19 // pred_fallthru
          _
      $region20: #{tpu_custom_call.1} parent=5 // pred_fallthru
        _
      %p141 = scmp.le.s32.totalorder 1, %s15
      %p142 = scmp.lt.s32.totalorder %s15, 3
      %p143 = pnand %p141, %p142
      %p144 = pneg %p143
      // Predicated region
      $region25: #{tpu_custom_call.1} parent=5 // pred_check
        _
      $region26: #{tpu_custom_call.1} parent=5 // pred_check_branch
        %146 = sbr.rel (%p143) target = $region28
      $region27: #{tpu_custom_call.1} parent=5 // pred_region
        %s147 = ssub.s32 %s15, 1
        %s148 = sand.u32 %s28, 1
        %s149 = scalar_lea.sflag [#allocation4], %s148
        %s150 = sand.u32 %s28, 1
        %s151 = smul.addr %s150, 16
        %s152 = scalar_lea.vmem [#allocation3], %s151
        // Predicated region
        $region29: #{tpu_custom_call.1} parent=27 // pred_check
          %p153 = pneg %p41
        $region30: #{tpu_custom_call.1} parent=27 // pred_check_branch
          %155 = sbr.rel (%p153) target = $region32
        $region31: #{tpu_custom_call.1} parent=27 // pred_region
          %156 = dma.done %s149, 256
        $region32: #{tpu_custom_call.1} parent=27 // pred_fallthru
          _
        // Predicated region
        $region33: #{tpu_custom_call.1} parent=27 // pred_check
          %p157 = pneg %p62
        $region34: #{tpu_custom_call.1} parent=27 // pred_check_branch
          %159 = sbr.rel (%p157) target = $region36
        $region35: #{tpu_custom_call.1} parent=27 // pred_region
          %160 = dma.done [#allocation7], 6144
        $region36: #{tpu_custom_call.1} parent=27 // pred_fallthru
          _
        %s161 = sand.u32 %s28, 1
        %s162 = scalar_lea.sflag [#allocation4], %s161
        %s163 = sand.u32 %s28, 1
        %s164 = smul.addr %s163, 16
        %s165 = scalar_lea.vmem [#allocation3], %s164
        %p166 = pneg %p41
        %p167 = pneg %p38
        %p168 = pneg %p62
        %p169 = pneg %p59
        %p170 = pneg %p88
        %p171 = pneg %p85
        %s172 = sand.u32 %s75, 1
        %s173 = scalar_lea.sflag [#allocation5], %s172
        %s174 = sand.u32 %s75, 1
        %s175 = smul.addr %s174, 16
        %s176 = scalar_lea.vmem [#allocation8], %s175
        %178 = vst [vmem:[#allocation2] sm:$0xff] 0.0
        %179 = vst [vmem:[#allocation2 + $0x18] sm:$0xff] 0.0
        %v180 = vld [vmem:[%s152] sm:$0xff]
        %v181 = vld [vmem:[%s152 + $0x8] sm:$0xff]
        %182 = vst [vmem:[#allocation2 + $0x8] sm:$0xff] %v180
        %183 = vst [vmem:[#allocation2 + $0x10] sm:$0xff] %v181
        %v184 = vld [vmem:[#allocation2 + $0x7] sm:$0xff]
        %v185 = vld [vmem:[#allocation2 + $0xf] sm:$0xff]
        %v186 = vld [vmem:[#allocation2 + $0x8] sm:$0xff]
        %v187 = vld [vmem:[#allocation2 + $0x10] sm:$0xff]
        %v188 = vld [vmem:[#allocation2 + $0x9] sm:$0xff]
        %v189 = vld [vmem:[#allocation2 + $0x11] sm:$0xff]
        %v190 = vpack.c.bf16 %v185, %v184
        %v191 = vpack.c.bf16 %v187, %v186
        %v192 = vpack.c.bf16 %v189, %v188
        %v193 = vld [vmem:[#allocation6] sm:$0xf]
        %v194 = vld [vmem:[#allocation6 + $0x4] sm:$0xf]
        %v195 = vld [vmem:[#allocation6 + $0x8] sm:$0xf]
        %v196 = vld [vmem:[#allocation6 + $0xc] sm:$0xf]
        %v197 = vld [vmem:[#allocation6 + $0x10] sm:$0xf]
        %v198 = vld [vmem:[#allocation6 + $0x14] sm:$0xf]
        %v199 = vld [vmem:[#allocation6 + $0x18] sm:$0xf]
        %v200 = vld [vmem:[#allocation6 + $0x1c] sm:$0xf]
        %v201 = vld [vmem:[#allocation6 + $0x20] sm:$0xf]
        %v202 = vld [vmem:[#allocation6 + $0x24] sm:$0xf]
        %v203 = vld [vmem:[#allocation6 + $0x28] sm:$0xf]
        %v204 = vld [vmem:[#allocation6 + $0x2c] sm:$0xf]
        %v205 = vld [vmem:[#allocation6 + $0x30] sm:$0xf]
        %v206 = vld [vmem:[#allocation6 + $0x34] sm:$0xf]
        %v207 = vld [vmem:[#allocation6 + $0x38] sm:$0xf]
        %v208 = vld [vmem:[#allocation6 + $0x3c] sm:$0xf]
        %v209 = vld [vmem:[#allocation6 + $0x40] sm:$0xf]
        %v210 = vld [vmem:[#allocation6 + $0x44] sm:$0xf]
        %v211 = vld [vmem:[#allocation6 + $0x48] sm:$0xf]
        %v212 = vld [vmem:[#allocation6 + $0x4c] sm:$0xf]
        %v213 = vld [vmem:[#allocation6 + $0x50] sm:$0xf]
        %v214 = vld [vmem:[#allocation6 + $0x54] sm:$0xf]
        %v215 = vld [vmem:[#allocation6 + $0x58] sm:$0xf]
        %v216 = vld [vmem:[#allocation6 + $0x5c] sm:$0xf]
        %v217 = vld [vmem:[#allocation6 + $0x60] sm:$0xf]
        %v218 = vld [vmem:[#allocation6 + $0x64] sm:$0xf]
        %v219 = vld [vmem:[#allocation6 + $0x68] sm:$0xf]
        %v220 = vld [vmem:[#allocation6 + $0x6c] sm:$0xf]
        %v221 = vld [vmem:[#allocation6 + $0x70] sm:$0xf]
        %v222 = vld [vmem:[#allocation6 + $0x74] sm:$0xf]
        %v223 = vld [vmem:[#allocation6 + $0x78] sm:$0xf]
        %v224 = vld [vmem:[#allocation6 + $0x7c] sm:$0xf]
        %v225 = vld [vmem:[#allocation6 + $0x80] sm:$0xf]
        %v226 = vld [vmem:[#allocation6 + $0x84] sm:$0xf]
        %v227 = vld [vmem:[#allocation6 + $0x88] sm:$0xf]
        %v228 = vld [vmem:[#allocation6 + $0x8c] sm:$0xf]
        %v229 = vld [vmem:[#allocation6 + $0x90] sm:$0xf]
        %v230 = vld [vmem:[#allocation6 + $0x94] sm:$0xf]
        %v231 = vld [vmem:[#allocation6 + $0x98] sm:$0xf]
        %v232 = vld [vmem:[#allocation6 + $0x9c] sm:$0xf]
        %v233 = vld [vmem:[#allocation6 + $0xa0] sm:$0xf]
        %v234 = vld [vmem:[#allocation6 + $0xa4] sm:$0xf]
        %v235 = vld [vmem:[#allocation6 + $0xa8] sm:$0xf]
        %v236 = vld [vmem:[#allocation6 + $0xac] sm:$0xf]
        %v237 = vld [vmem:[#allocation6 + $0xb0] sm:$0xf]
        %v238 = vld [vmem:[#allocation6 + $0xb4] sm:$0xf]
        %v239 = vld [vmem:[#allocation6 + $0xb8] sm:$0xf]
        %v240 = vld [vmem:[#allocation6 + $0xbc] sm:$0xf]
        %v289 = vunpack.c.l.b16 %v193
        %v290 = vunpack.c.l.b16 %v194
        %v291 = vunpack.c.l.b16 %v195
        %v292 = vunpack.c.l.b16 %v196
        %v293 = vunpack.c.l.b16 %v197
        %v294 = vunpack.c.l.b16 %v198
        %v295 = vunpack.c.l.b16 %v199
        %v296 = vunpack.c.l.b16 %v200
        %v297 = vunpack.c.l.b16 %v201
        %v298 = vunpack.c.l.b16 %v202
        %v299 = vunpack.c.l.b16 %v203
        %v300 = vunpack.c.l.b16 %v204
        %v301 = vunpack.c.l.b16 %v205
        %v302 = vunpack.c.l.b16 %v206
        %v303 = vunpack.c.l.b16 %v207
        %v304 = vunpack.c.l.b16 %v208
        %v305 = vunpack.c.l.b16 %v209
        %v306 = vunpack.c.l.b16 %v210
        %v307 = vunpack.c.l.b16 %v211
        %v308 = vunpack.c.l.b16 %v212
        %v309 = vunpack.c.l.b16 %v213
        %v310 = vunpack.c.l.b16 %v214
        %v311 = vunpack.c.l.b16 %v215
        %v312 = vunpack.c.l.b16 %v216
        %v313 = vunpack.c.l.b16 %v217
        %v314 = vunpack.c.l.b16 %v218
        %v315 = vunpack.c.l.b16 %v219
        %v316 = vunpack.c.l.b16 %v220
        %v317 = vunpack.c.l.b16 %v221
        %v318 = vunpack.c.l.b16 %v222
        %v319 = vunpack.c.l.b16 %v223
        %v320 = vunpack.c.l.b16 %v224
        %v321 = vunpack.c.l.b16 %v225
        %v322 = vunpack.c.l.b16 %v226
        %v323 = vunpack.c.l.b16 %v227
        %v324 = vunpack.c.l.b16 %v228
        %v325 = vunpack.c.l.b16 %v229
        %v326 = vunpack.c.l.b16 %v230
        %v327 = vunpack.c.l.b16 %v231
        %v328 = vunpack.c.l.b16 %v232
        %v329 = vunpack.c.l.b16 %v233
        %v330 = vunpack.c.l.b16 %v234
        %v331 = vunpack.c.l.b16 %v235
        %v332 = vunpack.c.l.b16 %v236
        %v333 = vunpack.c.l.b16 %v237
        %v334 = vunpack.c.l.b16 %v238
        %v335 = vunpack.c.l.b16 %v239
        %v336 = vunpack.c.l.b16 %v240
        %v337 = vpack.c.b16 %v290, %v289
        %v338 = vpack.c.b16 %v292, %v291
        %v339 = vpack.c.b16 %v294, %v293
        %v340 = vpack.c.b16 %v296, %v295
        %v341 = vpack.c.b16 %v298, %v297
        %v342 = vpack.c.b16 %v300, %v299
        %v343 = vpack.c.b16 %v302, %v301
        %v344 = vpack.c.b16 %v304, %v303
        %v345 = vpack.c.b16 %v306, %v305
        %v346 = vpack.c.b16 %v308, %v307
        %v347 = vpack.c.b16 %v310, %v309
        %v348 = vpack.c.b16 %v312, %v311
        %v349 = vpack.c.b16 %v314, %v313
        %v350 = vpack.c.b16 %v316, %v315
        %v351 = vpack.c.b16 %v318, %v317
        %v352 = vpack.c.b16 %v320, %v319
        %v353 = vpack.c.b16 %v322, %v321
        %v354 = vpack.c.b16 %v324, %v323
        %v355 = vpack.c.b16 %v326, %v325
        %v356 = vpack.c.b16 %v328, %v327
        %v357 = vpack.c.b16 %v330, %v329
        %v358 = vpack.c.b16 %v332, %v331
        %v359 = vpack.c.b16 %v334, %v333
        %v360 = vpack.c.b16 %v336, %v335
        %385 = vmatprep.subr.bf16.mxu0 0
        %386 = vmatpush1.bf16.msra.mxu0 %v337
        %387 = vmatprep.subr.bf16.mxu0 0
        %388 = vmatpush1.bf16.msra.mxu0 %v338
        %389 = vmatprep.subr.bf16.mxu0 0
        %390 = vmatpush1.bf16.msra.mxu0 %v339
        %391 = vmatprep.subr.bf16.mxu0 0
        %392 = vmatpush1.bf16.msra.mxu0 %v340
        %393 = vmatprep.subr.bf16.mxu0 0
        %394 = vmatpush1.bf16.msra.mxu0 %v341
        %395 = vmatprep.subr.bf16.mxu0 0
        %396 = vmatpush1.bf16.msra.mxu0 %v342
        %397 = vmatprep.subr.bf16.mxu0 0
        %398 = vmatpush1.bf16.msra.mxu0 %v343
        %399 = vmatprep.subr.bf16.mxu0 0
        %400 = vmatpush1.bf16.msra.mxu0 %v344
        %401 = vmatprep.subr.bf16.mxu0 0
        %402 = vmatpush1.bf16.msra.mxu0 %v345
        %403 = vmatprep.subr.bf16.mxu0 0
        %404 = vmatpush1.bf16.msra.mxu0 %v346
        %405 = vmatprep.subr.bf16.mxu0 0
        %406 = vmatpush1.bf16.msra.mxu0 %v347
        %407 = vmatprep.subr.bf16.mxu0 0
        %408 = vmatpush1.bf16.msra.mxu0 %v348
        %409 = vmatprep.subr.bf16.mxu0 0
        %410 = vmatpush1.bf16.msra.mxu0 %v349
        %411 = vmatprep.subr.bf16.mxu0 0
        %412 = vmatpush1.bf16.msra.mxu0 %v350
        %413 = vmatprep.subr.bf16.mxu0 0
        %414 = vmatpush1.bf16.msra.mxu0 %v351
        %415 = vmatprep.subr.bf16.mxu0 0
        %416 = vmatpush1.bf16.msra.mxu0 %v352
        %417 = vmatprep.mubr.bf16.mxu0 %v191
        %418 = vmatmul.mubr.bf16.gmra.mrb[0].mxu0 %v190
        %v419 = vpop.f32.mrb[0].mxu0
        %v420 = vadd.f32 0.0, %v419
        %v421 = vpop.f32.mrb[0].mxu0
        %v422 = vpop.f32.mrb[0].mxu0
        %v423 = vadd.f32 0.0, %v422
        %v424 = vpop.f32.mrb[0].mxu0
        %425 = vdwg.mxu0
        %426 = vmatprep.subr.bf16.mxu0 0
        %427 = vmatpush1.bf16.msra.mxu0 %v353
        %428 = vmatprep.subr.bf16.mxu0 0
        %429 = vmatpush1.bf16.msra.mxu0 %v354
        %430 = vmatprep.subr.bf16.mxu0 0
        %431 = vmatpush1.bf16.msra.mxu0 %v355
        %432 = vmatprep.subr.bf16.mxu0 0
        %433 = vmatpush1.bf16.msra.mxu0 %v356
        %434 = vmatprep.subr.bf16.mxu0 0
        %435 = vmatpush1.bf16.msra.mxu0 %v357
        %436 = vmatprep.subr.bf16.mxu0 0
        %437 = vmatpush1.bf16.msra.mxu0 %v358
        %438 = vmatprep.subr.bf16.mxu0 0
        %439 = vmatpush1.bf16.msra.mxu0 %v359
        %440 = vmatprep.subr.bf16.mxu0 0
        %441 = vmatpush1.bf16.msra.mxu0 %v360
        %442 = vmatprep.subr.bf16.mxu0 0
        %443 = vmatpush1.bf16.msra.mxu0 0
        %444 = vmatprep.subr.bf16.mxu0 0
        %445 = vmatpush1.bf16.msra.mxu0 0
        %446 = vmatprep.subr.bf16.mxu0 0
        %447 = vmatpush1.bf16.msra.mxu0 0
        %448 = vmatprep.subr.bf16.mxu0 0
        %449 = vmatpush1.bf16.msra.mxu0 0
        %450 = vmatprep.subr.bf16.mxu0 0
        %451 = vmatpush1.bf16.msra.mxu0 0
        %452 = vmatprep.subr.bf16.mxu0 0
        %453 = vmatpush1.bf16.msra.mxu0 0
        %454 = vmatprep.subr.bf16.mxu0 0
        %455 = vmatpush1.bf16.msra.mxu0 0
        %456 = vmatprep.subr.bf16.mxu0 0
        %457 = vmatpush1.bf16.msra.mxu0 0
        %458 = vmatprep.mubr.bf16.mxu0 0
        %459 = vmatmul.mubr.bf16.gmra.mrb[0].mxu0 %v192
        %v460 = vpop.f32.mrb[0].mxu0
        %v461 = vadd.f32 %v420, %v460
        %v462 = vpop.f32.mrb[0].mxu0
        %v463 = vpop.f32.mrb[0].mxu0
        %v464 = vadd.f32 %v423, %v463
        %v465 = vpop.f32.mrb[0].mxu0
        %466 = vdwg.mxu0
        %467 = vst [vmem:[#allocation2 + $0x8] sm:$0xff] %v461
        %468 = vst [vmem:[#allocation2 + $0x10] sm:$0xff] %v464
        %v469 = vld [vmem:[#allocation2 + $0x7] sm:$0xff]
        %v470 = vld [vmem:[#allocation2 + $0xf] sm:$0xff]
        %v471 = vld [vmem:[#allocation2 + $0x8] sm:$0xff]
        %v472 = vld [vmem:[#allocation2 + $0x10] sm:$0xff]
        %v473 = vld [vmem:[#allocation2 + $0x9] sm:$0xff]
        %v474 = vld [vmem:[#allocation2 + $0x11] sm:$0xff]
        %v475 = vpack.c.bf16 %v470, %v469
        %v476 = vpack.c.bf16 %v472, %v471
        %v477 = vpack.c.bf16 %v474, %v473
        %s478 = scalar_lea.vmem [#allocation6], 192
        %v479 = vld [vmem:[%s478] sm:$0xf]
        %v480 = vld [vmem:[%s478 + $0x4] sm:$0xf]
        %v481 = vld [vmem:[%s478 + $0x8] sm:$0xf]
        %v482 = vld [vmem:[%s478 + $0xc] sm:$0xf]
        %v483 = vld [vmem:[%s478 + $0x10] sm:$0xf]
        %v484 = vld [vmem:[%s478 + $0x14] sm:$0xf]
        %v485 = vld [vmem:[%s478 + $0x18] sm:$0xf]
        %v486 = vld [vmem:[%s478 + $0x1c] sm:$0xf]
        %v487 = vld [vmem:[%s478 + $0x20] sm:$0xf]
        %v488 = vld [vmem:[%s478 + $0x24] sm:$0xf]
        %v489 = vld [vmem:[%s478 + $0x28] sm:$0xf]
        %v490 = vld [vmem:[%s478 + $0x2c] sm:$0xf]
        %v491 = vld [vmem:[%s478 + $0x30] sm:$0xf]
        %v492 = vld [vmem:[%s478 + $0x34] sm:$0xf]
        %v493 = vld [vmem:[%s478 + $0x38] sm:$0xf]
        %v494 = vld [vmem:[%s478 + $0x3c] sm:$0xf]
        %v495 = vld [vmem:[%s478 + $0x40] sm:$0xf]
        %v496 = vld [vmem:[%s478 + $0x44] sm:$0xf]
        %v497 = vld [vmem:[%s478 + $0x48] sm:$0xf]
        %v498 = vld [vmem:[%s478 + $0x4c] sm:$0xf]
        %v499 = vld [vmem:[%s478 + $0x50] sm:$0xf]
        %v500 = vld [vmem:[%s478 + $0x54] sm:$0xf]
        %v501 = vld [vmem:[%s478 + $0x58] sm:$0xf]
        %v502 = vld [vmem:[%s478 + $0x5c] sm:$0xf]
        %v503 = vld [vmem:[%s478 + $0x60] sm:$0xf]
        %v504 = vld [vmem:[%s478 + $0x64] sm:$0xf]
        %v505 = vld [vmem:[%s478 + $0x68] sm:$0xf]
        %v506 = vld [vmem:[%s478 + $0x6c] sm:$0xf]
        %v507 = vld [vmem:[%s478 + $0x70] sm:$0xf]
        %v508 = vld [vmem:[%s478 + $0x74] sm:$0xf]
        %v509 = vld [vmem:[%s478 + $0x78] sm:$0xf]
        %v510 = vld [vmem:[%s478 + $0x7c] sm:$0xf]
        %v511 = vld [vmem:[%s478 + $0x80] sm:$0xf]
        %v512 = vld [vmem:[%s478 + $0x84] sm:$0xf]
        %v513 = vld [vmem:[%s478 + $0x88] sm:$0xf]
        %v514 = vld [vmem:[%s478 + $0x8c] sm:$0xf]
        %v515 = vld [vmem:[%s478 + $0x90] sm:$0xf]
        %v516 = vld [vmem:[%s478 + $0x94] sm:$0xf]
        %v517 = vld [vmem:[%s478 + $0x98] sm:$0xf]
        %v518 = vld [vmem:[%s478 + $0x9c] sm:$0xf]
        %v519 = vld [vmem:[%s478 + $0xa0] sm:$0xf]
        %v520 = vld [vmem:[%s478 + $0xa4] sm:$0xf]
        %v521 = vld [vmem:[%s478 + $0xa8] sm:$0xf]
        %v522 = vld [vmem:[%s478 + $0xac] sm:$0xf]
        %v523 = vld [vmem:[%s478 + $0xb0] sm:$0xf]
        %v524 = vld [vmem:[%s478 + $0xb4] sm:$0xf]
        %v525 = vld [vmem:[%s478 + $0xb8] sm:$0xf]
        %v526 = vld [vmem:[%s478 + $0xbc] sm:$0xf]
        %v575 = vunpack.c.l.b16 %v479
        %v576 = vunpack.c.l.b16 %v480
        %v577 = vunpack.c.l.b16 %v481
        %v578 = vunpack.c.l.b16 %v482
        %v579 = vunpack.c.l.b16 %v483
        %v580 = vunpack.c.l.b16 %v484
        %v581 = vunpack.c.l.b16 %v485
        %v582 = vunpack.c.l.b16 %v486
        %v583 = vunpack.c.l.b16 %v487
        %v584 = vunpack.c.l.b16 %v488
        %v585 = vunpack.c.l.b16 %v489
        %v586 = vunpack.c.l.b16 %v490
        %v587 = vunpack.c.l.b16 %v491
        %v588 = vunpack.c.l.b16 %v492
        %v589 = vunpack.c.l.b16 %v493
        %v590 = vunpack.c.l.b16 %v494
        %v591 = vunpack.c.l.b16 %v495
        %v592 = vunpack.c.l.b16 %v496
        %v593 = vunpack.c.l.b16 %v497
        %v594 = vunpack.c.l.b16 %v498
        %v595 = vunpack.c.l.b16 %v499
        %v596 = vunpack.c.l.b16 %v500
        %v597 = vunpack.c.l.b16 %v501
        %v598 = vunpack.c.l.b16 %v502
        %v599 = vunpack.c.l.b16 %v503
        %v600 = vunpack.c.l.b16 %v504
        %v601 = vunpack.c.l.b16 %v505
        %v602 = vunpack.c.l.b16 %v506
        %v603 = vunpack.c.l.b16 %v507
        %v604 = vunpack.c.l.b16 %v508
        %v605 = vunpack.c.l.b16 %v509
        %v606 = vunpack.c.l.b16 %v510
        %v607 = vunpack.c.l.b16 %v511
        %v608 = vunpack.c.l.b16 %v512
        %v609 = vunpack.c.l.b16 %v513
        %v610 = vunpack.c.l.b16 %v514
        %v611 = vunpack.c.l.b16 %v515
        %v612 = vunpack.c.l.b16 %v516
        %v613 = vunpack.c.l.b16 %v517
        %v614 = vunpack.c.l.b16 %v518
        %v615 = vunpack.c.l.b16 %v519
        %v616 = vunpack.c.l.b16 %v520
        %v617 = vunpack.c.l.b16 %v521
        %v618 = vunpack.c.l.b16 %v522
        %v619 = vunpack.c.l.b16 %v523
        %v620 = vunpack.c.l.b16 %v524
        %v621 = vunpack.c.l.b16 %v525
        %v622 = vunpack.c.l.b16 %v526
        %v623 = vpack.c.b16 %v576, %v575
        %v624 = vpack.c.b16 %v578, %v577
        %v625 = vpack.c.b16 %v580, %v579
        %v626 = vpack.c.b16 %v582, %v581
        %v627 = vpack.c.b16 %v584, %v583
        %v628 = vpack.c.b16 %v586, %v585
        %v629 = vpack.c.b16 %v588, %v587
        %v630 = vpack.c.b16 %v590, %v589
        %v631 = vpack.c.b16 %v592, %v591
        %v632 = vpack.c.b16 %v594, %v593
        %v633 = vpack.c.b16 %v596, %v595
        %v634 = vpack.c.b16 %v598, %v597
        %v635 = vpack.c.b16 %v600, %v599
        %v636 = vpack.c.b16 %v602, %v601
        %v637 = vpack.c.b16 %v604, %v603
        %v638 = vpack.c.b16 %v606, %v605
        %v639 = vpack.c.b16 %v608, %v607
        %v640 = vpack.c.b16 %v610, %v609
        %v641 = vpack.c.b16 %v612, %v611
        %v642 = vpack.c.b16 %v614, %v613
        %v643 = vpack.c.b16 %v616, %v615
        %v644 = vpack.c.b16 %v618, %v617
        %v645 = vpack.c.b16 %v620, %v619
        %v646 = vpack.c.b16 %v622, %v621
        %671 = vmatprep.subr.bf16.mxu0 0
        %672 = vmatpush1.bf16.msra.mxu0 %v623
        %673 = vmatprep.subr.bf16.mxu0 0
        %674 = vmatpush1.bf16.msra.mxu0 %v624
        %675 = vmatprep.subr.bf16.mxu0 0
        %676 = vmatpush1.bf16.msra.mxu0 %v625
        %677 = vmatprep.subr.bf16.mxu0 0
        %678 = vmatpush1.bf16.msra.mxu0 %v626
        %679 = vmatprep.subr.bf16.mxu0 0
        %680 = vmatpush1.bf16.msra.mxu0 %v627
        %681 = vmatprep.subr.bf16.mxu0 0
        %682 = vmatpush1.bf16.msra.mxu0 %v628
        %683 = vmatprep.subr.bf16.mxu0 0
        %684 = vmatpush1.bf16.msra.mxu0 %v629
        %685 = vmatprep.subr.bf16.mxu0 0
        %686 = vmatpush1.bf16.msra.mxu0 %v630
        %687 = vmatprep.subr.bf16.mxu0 0
        %688 = vmatpush1.bf16.msra.mxu0 %v631
        %689 = vmatprep.subr.bf16.mxu0 0
        %690 = vmatpush1.bf16.msra.mxu0 %v632
        %691 = vmatprep.subr.bf16.mxu0 0
        %692 = vmatpush1.bf16.msra.mxu0 %v633
        %693 = vmatprep.subr.bf16.mxu0 0
        %694 = vmatpush1.bf16.msra.mxu0 %v634
        %695 = vmatprep.subr.bf16.mxu0 0
        %696 = vmatpush1.bf16.msra.mxu0 %v635
        %697 = vmatprep.subr.bf16.mxu0 0
        %698 = vmatpush1.bf16.msra.mxu0 %v636
        %699 = vmatprep.subr.bf16.mxu0 0
        %700 = vmatpush1.bf16.msra.mxu0 %v637
        %701 = vmatprep.subr.bf16.mxu0 0
        %702 = vmatpush1.bf16.msra.mxu0 %v638
        %703 = vmatprep.mubr.bf16.mxu0 %v476
        %704 = vmatmul.mubr.bf16.gmra.mrb[0].mxu0 %v475
        %v705 = vpop.f32.mrb[0].mxu0
        %v706 = vadd.f32 0.0, %v705
        %v707 = vpop.f32.mrb[0].mxu0
        %v708 = vpop.f32.mrb[0].mxu0
        %v709 = vadd.f32 0.0, %v708
        %v710 = vpop.f32.mrb[0].mxu0
        %711 = vdwg.mxu0
        %712 = vmatprep.subr.bf16.mxu0 0
        %713 = vmatpush1.bf16.msra.mxu0 %v639
        %714 = vmatprep.subr.bf16.mxu0 0
        %715 = vmatpush1.bf16.msra.mxu0 %v640
        %716 = vmatprep.subr.bf16.mxu0 0
        %717 = vmatpush1.bf16.msra.mxu0 %v641
        %718 = vmatprep.subr.bf16.mxu0 0
        %719 = vmatpush1.bf16.msra.mxu0 %v642
        %720 = vmatprep.subr.bf16.mxu0 0
        %721 = vmatpush1.bf16.msra.mxu0 %v643
        %722 = vmatprep.subr.bf16.mxu0 0
        %723 = vmatpush1.bf16.msra.mxu0 %v644
        %724 = vmatprep.subr.bf16.mxu0 0
        %725 = vmatpush1.bf16.msra.mxu0 %v645
        %726 = vmatprep.subr.bf16.mxu0 0
        %727 = vmatpush1.bf16.msra.mxu0 %v646
        %728 = vmatprep.subr.bf16.mxu0 0
        %729 = vmatpush1.bf16.msra.mxu0 0
        %730 = vmatprep.subr.bf16.mxu0 0
        %731 = vmatpush1.bf16.msra.mxu0 0
        %732 = vmatprep.subr.bf16.mxu0 0
        %733 = vmatpush1.bf16.msra.mxu0 0
        %734 = vmatprep.subr.bf16.mxu0 0
        %735 = vmatpush1.bf16.msra.mxu0 0
        %736 = vmatprep.subr.bf16.mxu0 0
        %737 = vmatpush1.bf16.msra.mxu0 0
        %738 = vmatprep.subr.bf16.mxu0 0
        %739 = vmatpush1.bf16.msra.mxu0 0
        %740 = vmatprep.subr.bf16.mxu0 0
        %741 = vmatpush1.bf16.msra.mxu0 0
        %742 = vmatprep.subr.bf16.mxu0 0
        %743 = vmatpush1.bf16.msra.mxu0 0
        %744 = vmatprep.mubr.bf16.mxu0 0
        %745 = vmatmul.mubr.bf16.gmra.mrb[0].mxu0 %v477
        %v746 = vpop.f32.mrb[0].mxu0
        %v747 = vadd.f32 %v706, %v746
        %v748 = vpop.f32.mrb[0].mxu0
        %v749 = vpop.f32.mrb[0].mxu0
        %v750 = vadd.f32 %v709, %v749
        %v751 = vpop.f32.mrb[0].mxu0
        %752 = vdwg.mxu0
        %753 = vst [vmem:[%s176] sm:$0xff] %v747
        %754 = vst [vmem:[%s176 + $0x8] sm:$0xff] %v750
        %s755 = sand.u32 %s75, 1
        %s756 = scalar_lea.sflag [#allocation5], %s755
        %s757 = sand.u32 %s75, 1
        %s758 = smul.addr %s757, 16
        %s759 = scalar_lea.vmem [#allocation8], %s758
        // Predicated region
        $region37: #{tpu_custom_call.1} parent=27 // pred_check
          %p760 = pneg %p85
        $region38: #{tpu_custom_call.1} parent=27 // pred_check_branch
          %762 = sbr.rel (%p760) target = $region40
        $region39: #{tpu_custom_call.1} parent=27 // pred_region
          %s764 = ssub.s32 256, 256
          %765 = vsyncadd %s756, %s764
          %s766 = smul.addr %s20, 2
          %s767 = smul.addr %s766, 128
          %s768 = scalar_lea.hbm %s2, %s767
          %s769 = sshll.u32 %s759, 4
          %s770 = int_to_ptr.vmem [resolvable:$true] %s769
          %775 = dma.vmem_to_hbm [thread:$0]  %s770, 256, %s768, %s756, 128, 128, 8
        $region40: #{tpu_custom_call.1} parent=27 // pred_fallthru
          _
      $region28: #{tpu_custom_call.1} parent=5 // pred_fallthru
        _
      %p776 = scmp.le.s32.totalorder 2, %s15
      // Predicated region
      $region41: #{tpu_custom_call.1} parent=5 // pred_check
        %p777 = pneg %p776
      $region42: #{tpu_custom_call.1} parent=5 // pred_check_branch
        %779 = sbr.rel (%p777) target = $region44
      $region43: #{tpu_custom_call.1} parent=5 // pred_region
        %s780 = ssub.s32 %s15, 2
        // Predicated region
        $region45: #{tpu_custom_call.1} parent=43 // pred_check
          %p781 = pneg %p91
        $region46: #{tpu_custom_call.1} parent=43 // pred_check_branch
          %783 = sbr.rel (%p781) target = $region48
        $region47: #{tpu_custom_call.1} parent=43 // pred_region
          %s784 = sand.u32 %s76, 1
          %s785 = scalar_lea.sflag [#allocation5], %s784
          %s786 = sand.u32 %s76, 1
          %s787 = smul.addr %s786, 16
          %s788 = scalar_lea.vmem [#allocation8], %s787
          %789 = dma.done %s785, 256
        $region48: #{tpu_custom_call.1} parent=43 // pred_fallthru
          _
      $region44: #{tpu_custom_call.1} parent=5 // pred_fallthru
        _
    $region6: #{tpu_custom_call.1} parent=1 // loop_footer
      %s19 = sadd.s32 1, %s15
    $region7: #{tpu_custom_call.1} parent=1 // loop_footer_branch
      %14 = sbr.rel target = $region3
    $region8: #{tpu_custom_call.1} parent=1 // loop_exit
      _
    %790 = vsyncpa [#allocation4], 1
    %s791 = scalar_lea.sflag [#allocation4], 1
    %792 = vsyncpa %s791, 1
    %793 = vsyncpa [#allocation7], 1
    %794 = vsyncpa [#allocation5], 1
    %s795 = scalar_lea.sflag [#allocation5], 1
    %796 = vsyncpa %s795, 1

</llo_original>
